<compile_context>
chip_gen: v7x
topology: tpu7x:2x2x1
jax: 0.10.0
libtpu: 0.0.40
codegen_flags: <defaults>
</compile_context>

<pallas_src>
import math

import jax
import jax.numpy as jnp
from jax import lax
from jax.experimental import pallas as pl
from jax.experimental.pallas import tpu as pltpu


# ---------------------------------------------------------------------------
# Kernels
# ---------------------------------------------------------------------------
def _dot_nt(x, w):
    # x: [tm, tk], w: [tn, tk] (torch layout) -> [tm, tn], f32 accumulation.
    # Contracting the last dims of both operands is the MXU's native
    # transposed-RHS matmul (no inserted XLU transpose).
    return lax.dot_general(
        x,
        w,
        dimension_numbers=(((1,), (1,)), ((), ())),
        preferred_element_type=jnp.float32,
    )


def _make_kernel(has_bias, k_axis):
    """Build a matmul kernel.

    k_axis is None -> single K step: no accumulator scratch, direct store.
    k_axis is int  -> K lives on grid axis `k_axis`; f32 VMEM accumulator with
                      pl.when init / finalize (bias folded into finalize).
    """
    if k_axis is None:
        if has_bias:
            def kernel(x_ref, w_ref, b_ref, o_ref):
                acc = _dot_nt(x_ref[...], w_ref[...])
                o_ref[...] = (acc + b_ref[...].astype(jnp.float32)).astype(
                    o_ref.dtype
                )
        else:
            def kernel(x_ref, w_ref, o_ref):
                o_ref[...] = _dot_nt(x_ref[...], w_ref[...]).astype(o_ref.dtype)
        return kernel

    if has_bias:
        def kernel(x_ref, w_ref, b_ref, o_ref, acc_ref):
            k = pl.program_id(k_axis)

            @pl.when(k == 0)
            def _():
                acc_ref[...] = jnp.zeros_like(acc_ref)

            acc_ref[...] += _dot_nt(x_ref[...], w_ref[...])

            @pl.when(k == pl.num_programs(k_axis) - 1)
            def _():
                o_ref[...] = (
                    acc_ref[...] + b_ref[...].astype(jnp.float32)
                ).astype(o_ref.dtype)
    else:
        def kernel(x_ref, w_ref, o_ref, acc_ref):
            k = pl.program_id(k_axis)

            @pl.when(k == 0)
            def _():
                acc_ref[...] = jnp.zeros_like(acc_ref)

            acc_ref[...] += _dot_nt(x_ref[...], w_ref[...])

            @pl.when(k == pl.num_programs(k_axis) - 1)
            def _():
                o_ref[...] = acc_ref[...].astype(o_ref.dtype)

    return kernel


# ---------------------------------------------------------------------------
# Tiling helpers
# ---------------------------------------------------------------------------
def _round_up(x, m):
    return ((x + m - 1) // m) * m


def _sublane_multiple(dtype):
    # f32 -> 8, bf16/f16 -> 16, int8/fp8 -> 32 (sub-32-bit packs along sublanes)
    return {4: 8, 2: 16, 1: 32}.get(jnp.dtype(dtype).itemsize, 8)


def _vmem_limit_bytes():
    cap = 64 * 1024 * 1024  # conservative fallback (v7x physical)
    try:
        cap = int(pltpu.get_tpu_info().vmem_capacity_bytes)
    except Exception:
        pass
    # ~75% of physical, capped, leaving headroom for compiler scratch.
    return min(int(cap * 0.75), 100 * 1024 * 1024)


def _tile_vmem_bytes(tm, tn, tk, in_itemsize, out_itemsize):
    # Double-buffered inputs/output + f32 accumulator + (tiny) bias buffer.
    x_b = 2 * tm * tk * in_itemsize
    w_b = 2 * tn * tk * in_itemsize
    acc = tm * tn * 4
    out = 2 * tm * tn * out_itemsize
    bias = 2 * tn * 4
    return x_b + w_b + acc + out + bias


def _pick_tile(dim, candidates):
    # candidates sorted descending; choose the one minimizing padded extent,
    # tie-break towards the largest tile.
    best_pad, best_c = None, None
    for c in candidates:
        pad = _round_up(dim, c)
        if best_pad is None or pad < best_pad:
            best_pad, best_c = pad, c
    return best_c


def _select_tiles(M, N, K, in_dtype, out_dtype, vmem_budget):
    sub = _sublane_multiple(in_dtype)
    in_sz = jnp.dtype(in_dtype).itemsize
    out_sz = jnp.dtype(out_dtype).itemsize
    narrow = in_sz < 4
    mn_ladder = [1024, 768, 512, 384, 256, 128] if narrow else [512, 384, 256, 128]
    k_ladder = [1024, 512, 256, 128] if narrow else [512, 256, 128]

    # M tile: skinny-M path keeps the whole (rounded) batch in one tile.
    m_sub = _round_up(M, sub)
    if m_sub <= 256:
        tm = m_sub
    else:
        tm = _pick_tile(M, mn_ladder)

    tn = 128 if N <= 128 else _pick_tile(N, mn_ladder)
    tk = 128 if K <= 128 else _pick_tile(K, k_ladder)

    def fits(a, b, c):
        return _tile_vmem_bytes(a, b, c, in_sz, out_sz) <= vmem_budget

    # Shrink to fit the VMEM budget: tk first, then tn, then tm.
    while not fits(tm, tn, tk) and tk > 128:
        tk = max(128, _round_up(tk // 2, 128))
    while not fits(tm, tn, tk) and tn > 128:
        tn = max(128, _round_up(tn // 2, 128))
    while not fits(tm, tn, tk) and tm > max(sub, 128):
        tm = max(128, _round_up(tm // 2, sub))
    return tm, tn, tk


# ---------------------------------------------------------------------------
# Forward wrapper
# ---------------------------------------------------------------------------
def linear_forward(x, weight, bias=None):
    """Pallas TPU equivalent of torch.nn.Linear.forward.

    x:      [batch, in_features]
    weight: [out_features, in_features]  (torch layout; NOT pre-transposed)
    bias:   [out_features] or None
    Returns x @ weight.T (+ bias), dtype = x.dtype (f32 accumulation inside).
    """
    M, K = x.shape
    N, K2 = weight.shape
    assert K == K2, "in_features mismatch between x and weight"
    if weight.dtype != x.dtype:
        weight = weight.astype(x.dtype)  # keep a single MXU input dtype
    out_dtype = x.dtype
    in_sz = jnp.dtype(x.dtype).itemsize
    out_sz = jnp.dtype(out_dtype).itemsize

    vmem_limit = _vmem_limit_bytes()
    tm, tn, tk = _select_tiles(M, N, K, x.dtype, out_dtype, int(vmem_limit * 0.75))

    M_pad = _round_up(M, tm)
    N_pad = _round_up(N, tn)
    K_pad = _round_up(K, tk)

    # v7x has 2 TensorCores: make sure there are >= 2 parallel (i, j) tiles.
    if (M_pad // tm) * (N_pad // tn) == 1:
        if tn % 256 == 0:
            tn //= 2
            N_pad = _round_up(N, tn)
        elif tm % 256 == 0:
            tm //= 2
            M_pad = _round_up(M, tm)

    gm, gn, gk = M_pad // tm, N_pad // tn, K_pad // tk
    multi_k = gk > 1
    skinny = gm == 1  # whole (padded) batch fits in one M tile -> drop i axis

    # Pad operands (zero K-padding contributes 0 to the accumulation).
    x_p = x if (M_pad, K_pad) == (M, K) else jnp.pad(
        x, ((0, M_pad - M), (0, K_pad - K)))
    w_p = weight if (N_pad, K_pad) == (N, K) else jnp.pad(
        weight, ((0, N_pad - N), (0, K_pad - K)))
    has_bias = bias is not None
    if has_bias:
        b_p = bias if N_pad == N else jnp.pad(bias, (0, N_pad - N))
        b2d = b_p.reshape(1, N_pad)

    # Grid / index maps (i axis dropped when skinny, k axis dropped when gk==1).
    if skinny and multi_k:
        grid = (gn, gk)
        x_map = lambda j, k: (0, k)
        w_map = lambda j, k: (j, k)
        b_map = lambda j, k: (0, j)
        o_map = lambda j, k: (0, j)
        sem = ("parallel", "arbitrary")
        k_axis = 1
    elif skinny:
        grid = (gn,)
        x_map = lambda j: (0, 0)
        w_map = lambda j: (j, 0)
        b_map = lambda j: (0, j)
        o_map = lambda j: (0, j)
        sem = ("parallel",)
        k_axis = None
    elif multi_k:
        grid = (gm, gn, gk)
        x_map = lambda i, j, k: (i, k)
        w_map = lambda i, j, k: (j, k)
        b_map = lambda i, j, k: (0, j)
        o_map = lambda i, j, k: (i, j)
        sem = ("parallel", "parallel", "arbitrary")
        k_axis = 2
    else:
        grid = (gm, gn)
        x_map = lambda i, j: (i, 0)
        w_map = lambda i, j: (j, 0)
        b_map = lambda i, j: (0, j)
        o_map = lambda i, j: (i, j)
        sem = ("parallel", "parallel")
        k_axis = None

    in_specs = [
        pl.BlockSpec((tm, tk), x_map),
        pl.BlockSpec((tn, tk), w_map),  # torch layout [N, K]
    ]
    inputs = [x_p, w_p]
    if has_bias:
        in_specs.append(pl.BlockSpec((1, tn), b_map))
        inputs.append(b2d)
    out_specs = pl.BlockSpec((tm, tn), o_map)
    scratch = [pltpu.VMEM((tm, tn), jnp.float32)] if multi_k else []

    # Advisory cost estimate (true, unpadded problem size).
    bytes_accessed = (
        M * K * in_sz
        + N * K * in_sz
        + M * N * out_sz
        + (N * jnp.dtype(bias.dtype).itemsize if has_bias else 0)
    )
    cost = pl.CostEstimate(
        flops=2 * M * K * N, transcendentals=0, bytes_accessed=bytes_accessed
    )

    out = pl.pallas_call(
        _make_kernel(has_bias, k_axis),
        out_shape=jax.ShapeDtypeStruct((M_pad, N_pad), out_dtype),
        grid_spec=pltpu.PrefetchScalarGridSpec(
            num_scalar_prefetch=0,
            grid=grid,
            in_specs=in_specs,
            out_specs=out_specs,
            scratch_shapes=scratch,
        ),
        compiler_params=pltpu.CompilerParams(
            dimension_semantics=sem,
            vmem_limit_bytes=vmem_limit,
        ),
        cost_estimate=cost,
    )(*inputs)

    if (M_pad, N_pad) != (M, N):
        out = out[:M, :N]
    return out


def init_linear_params(key, in_features, out_features, bias=True, dtype=jnp.float32):
    """Deterministic init mirroring torch's reset_parameters: U(-stdv, stdv)."""
    stdv = 1.0 / math.sqrt(in_features)
    kw, kb = jax.random.split(key)
    weight = jax.random.uniform(
        kw, (out_features, in_features), dtype=dtype, minval=-stdv, maxval=stdv
    )
    b = None
    if bias:
        b = jax.random.uniform(
            kb, (out_features,), dtype=dtype, minval=-stdv, maxval=stdv
        )
    return weight, b


if __name__ == "__main__":
    key = jax.random.PRNGKey(0)
    k_x, k_p, k_x2, k_p2, k_x3, k_p3, k_x4, k_p4 = jax.random.split(key, 8)

    # --- 1) small demo shapes (single-K fast path, skinny-M, fused bias) ---
    batch, in_f, out_f = 8, 32, 64
    x = jax.random.normal(k_x, (batch, in_f), dtype=jnp.float32)
    w, b = init_linear_params(k_p, in_f, out_f, bias=True)
    out = jax.block_until_ready(linear_forward(x, w, b))
    ref = x @ w.T + b
    assert out.shape == (batch, out_f)
    assert jnp.allclose(out, ref, atol=1e-5, rtol=1e-5)

    # --- 2) skinny-M, multi-K accumulation; bias and no-bias paths ---
    b2_m, b2_k, b2_n = 32, 1024, 256
    x2 = jax.random.normal(k_x2, (b2_m, b2_k), dtype=jnp.float32)
    w2, bias2 = init_linear_params(k_p2, b2_k, b2_n, bias=True)
    out_b = jax.block_until_ready(linear_forward(x2, w2, bias2))
    out_nb = jax.block_until_ready(linear_forward(x2, w2, None))
    assert jnp.allclose(out_b, x2 @ w2.T + bias2, atol=1e-4, rtol=1e-4)
    assert jnp.allclose(out_nb, x2 @ w2.T, atol=1e-4, rtol=1e-4)

    # --- 3) general path: multiple M/N tiles + K accumulation, odd N ---
    b3_m, b3_k, b3_n = 1024, 384, 640
    x3 = jax.random.normal(k_x3, (b3_m, b3_k), dtype=jnp.float32)
    w3, bias3 = init_linear_params(k_p3, b3_k, b3_n, bias=True)
    out3 = jax.block_until_ready(linear_forward(x3, w3, bias3))
    assert out3.shape == (b3_m, b3_n)
    assert jnp.allclose(out3, x3 @ w3.T + bias3, atol=1e-4, rtol=1e-4)

    # --- 4) bf16 end-to-end path (dtype-aware sublane rounding, f32 accum) ---
    b4_m, b4_k, b4_n = 16, 256, 128
    x4 = jax.random.normal(k_x4, (b4_m, b4_k), dtype=jnp.float32).astype(jnp.bfloat16)
    w4, bias4 = init_linear_params(k_p4, b4_k, b4_n, bias=True)
    w4 = w4.astype(jnp.bfloat16)
    out4 = jax.block_until_ready(linear_forward(x4, w4, bias4))
    ref4 = (
        x4.astype(jnp.float32) @ w4.astype(jnp.float32).T + bias4
    )
    assert out4.dtype == jnp.bfloat16
    assert jnp.allclose(out4.astype(jnp.float32), ref4, atol=5e-2, rtol=5e-2)

    print("KERNEL_OK")
</pallas_src>

<mosaic_0001>
module attributes {stable_mosaic.version = 11 : i64} {
  func.func @kernel(%arg0: i32, %arg1: memref<8x128xf32, #tpu.memory_space<vmem>>, %arg2: memref<128x128xf32, #tpu.memory_space<vmem>>, %arg3: memref<1x128xf32, #tpu.memory_space<vmem>>, %arg4: memref<8x128xf32, #tpu.memory_space<vmem>>) attributes {dimension_semantics = [#tpu.dimension_semantics<parallel>], iteration_bounds = array<i64: 1>, scalar_prefetch = 0 : i64, scratch_operands = 0 : i64, tpu.core_type = #tpu.core_type<tc>, window_params = [{pipeline_mode = #tpu.pipeline_mode<synchronous>, transform_indices = @transform_0, window_bounds = array<i64: 8, 128>}, {transform_indices = @transform_1, window_bounds = array<i64: 128, 128>}, {transform_indices = @transform_2, window_bounds = array<i64: 1, 128>}, {transform_indices = @transform_3, window_bounds = array<i64: 8, 128>}]} {
    %c0 = arith.constant 0 : index
    %c0_0 = arith.constant 0 : index
    %0 = vector.load %arg1[%c0, %c0_0] : memref<8x128xf32, #tpu.memory_space<vmem>>, vector<8x128xf32>
    %c0_1 = arith.constant 0 : index
    %c0_2 = arith.constant 0 : index
    %1 = vector.load %arg2[%c0_1, %c0_2] : memref<128x128xf32, #tpu.memory_space<vmem>>, vector<128x128xf32>
    %cst = arith.constant dense<0.000000e+00> : vector<8x128xf32>
    %2 = tpu.matmul %0, %1, %cst {dimension_numbers = #tpu.dot_dimension_numbers<[1], [1], [0], [0], [0, 0, 1, 0], [], []>} : vector<8x128xf32>, vector<128x128xf32>, vector<8x128xf32> -> vector<8x128xf32>
    %c0_3 = arith.constant 0 : index
    %c0_4 = arith.constant 0 : index
    %3 = vector.load %arg3[%c0_3, %c0_4] : memref<1x128xf32, #tpu.memory_space<vmem>>, vector<1x128xf32>
    %4 = vector.broadcast %3 : vector<1x128xf32> to vector<8x128xf32>
    %5 = arith.addf %2, %4 : vector<8x128xf32>
    %c0_5 = arith.constant 0 : index
    %c0_6 = arith.constant 0 : index
    %6 = vector.load %arg4[%c0_5, %c0_6] : memref<8x128xf32, #tpu.memory_space<vmem>>, vector<8x128xf32>
    tpu.vector_store %arg4[%c0_5, %c0_6], %5 {strides = array<i32>} : memref<8x128xf32, #tpu.memory_space<vmem>>, vector<8x128xf32>,
    return
  }
  func.func @transform_0(%arg0: i32) -> (i32, i32) {
    %c0_i32 = arith.constant 0 : i32
    %c0_i32_0 = arith.constant 0 : i32
    %c0_i32_1 = arith.constant 0 : i32
    return %c0_i32, %c0_i32_0 : i32, i32
  }
  func.func @transform_1(%arg0: i32) -> (i32, i32) {
    %c0_i32 = arith.constant 0 : i32
    %c0_i32_0 = arith.constant 0 : i32
    return %arg0, %c0_i32 : i32, i32
  }
  func.func @transform_2(%arg0: i32) -> (i32, i32) {
    %c0_i32 = arith.constant 0 : i32
    %c0_i32_0 = arith.constant 0 : i32
    return %c0_i32, %arg0 : i32, i32
  }
  func.func @transform_3(%arg0: i32) -> (i32, i32) {
    %c0_i32 = arith.constant 0 : i32
    %c0_i32_0 = arith.constant 0 : i32
    return %c0_i32, %arg0 : i32, i32
  }
}

</mosaic_0001>

<llo_original>
// kernel: tpu_custom_call.1
$region0: #{tpu_custom_call.1}
  #allocation0 [shape = 'u32[]', space=smem, size = 0x4, offset = 0x4, fixed_abs, tag = 'smem constant byte address 0x4 - core index']
  #allocation1 [shape = 'u32[144,128]{1,0:T(1,128)}', space=vmem, size = 0x12000, scoped, tag = 'internal scratch']
  %s0 = inlined_call_operand.hbm [shape: f32[8,128], index: 0, kind: input, shape index: {}]
  %s1 = inlined_call_operand.hbm [shape: f32[128,128], index: 1, kind: input, shape index: {}]
  %s2 = inlined_call_operand.vmem [shape: f32[1,128], index: 2, kind: input, shape index: {}]
  %s3 = inlined_call_operand.hbm [shape: f32[8,128], index: 3, kind: output, shape index: {}]
  %s4 = sld [smem:[#allocation0]]
  $region30: #{tpu_custom_call.1} parent=0
    _
  %s6 = ssub.s32 1, %s4
  %s7 = scalar_select 0, %s6, %s4
  $region1: #{tpu_custom_call.1} parent=0
    #allocation2 [shape = 'u8[4096]{0}', space=vmem, size = 0x1000, scoped, tag = 'input window, operand 0, single buffered']
    #allocation3 [shape = 's32[1]{0}', space=sflag, size = 0x4, scoped, tag = 'scoped memory for tpu_custom_call.1']
    #allocation4 [shape = 's32[1]{0}', space=sflag, size = 0x4, scoped, tag = 'scoped memory for tpu_custom_call.1']
    #allocation5 [shape = 'u8[65536]{0}', space=vmem, size = 0x10000, scoped, tag = 'input window, operand 1, single buffered']
    #allocation6 [shape = 's32[1]{0}', space=sflag, size = 0x4, scoped, tag = 'scoped memory for tpu_custom_call.1']
    #allocation7 [shape = 'u8[4096]{0}', space=vmem, size = 0x1000, scoped, tag = 'output window, operand 0, single buffered']
    %8 = vsyncpa [#allocation3], 0
    %9 = vsyncpa [#allocation6], 0
    %10 = vsyncpa [#allocation4], 0
    // Predicated region
    $region2: #{tpu_custom_call.1} parent=1 // pred_check
      _
    $region3: #{tpu_custom_call.1} parent=1 // pred_check_branch
      %12 = sbr.rel (0) target = $region5
    $region4: #{tpu_custom_call.1} parent=1 // pred_region
      %s14 = ssub.s32 128, 128
      %15 = vsyncadd [#allocation3], %s14
      %s17 = sshll.u32 [#allocation2], 4
      %s18 = int_to_ptr.vmem [resolvable:$true] %s17
      %20 = dma.hbm_to_vmem [thread:$0]  %s0, 128, %s18, [#allocation3]
    $region5: #{tpu_custom_call.1} parent=1 // pred_fallthru
      _
    // Predicated region
    $region6: #{tpu_custom_call.1} parent=1 // pred_check
      _
    $region7: #{tpu_custom_call.1} parent=1 // pred_check_branch
      %22 = sbr.rel (0) target = $region9
    $region8: #{tpu_custom_call.1} parent=1 // pred_region
      %s24 = ssub.s32 2048, 2048
      %25 = vsyncadd [#allocation6], %s24
      %s26 = sshll.u32 [#allocation5], 4
      %s27 = int_to_ptr.vmem [resolvable:$true] %s26
      %32 = dma.hbm_to_vmem [thread:$0]  %s1, 2048, %s27, [#allocation6], 128, 128, 8
    $region9: #{tpu_custom_call.1} parent=1 // pred_fallthru
      _
    // Predicated region
    $region10: #{tpu_custom_call.1} parent=1 // pred_check
      _
    $region11: #{tpu_custom_call.1} parent=1 // pred_check_branch
      %34 = sbr.rel (0) target = $region13
    $region12: #{tpu_custom_call.1} parent=1 // pred_region
      _
    $region13: #{tpu_custom_call.1} parent=1 // pred_fallthru
      _
    // Predicated region
    $region14: #{tpu_custom_call.1} parent=1 // pred_check
      _
    $region15: #{tpu_custom_call.1} parent=1 // pred_check_branch
      %36 = sbr.rel (0) target = $region17
    $region16: #{tpu_custom_call.1} parent=1 // pred_region
      %37 = dma.done [#allocation3], 128
    $region17: #{tpu_custom_call.1} parent=1 // pred_fallthru
      _
    // Predicated region
    $region18: #{tpu_custom_call.1} parent=1 // pred_check
      _
    $region19: #{tpu_custom_call.1} parent=1 // pred_check_branch
      %39 = sbr.rel (0) target = $region21
    $region20: #{tpu_custom_call.1} parent=1 // pred_region
      %40 = dma.done [#allocation6], 2048
    $region21: #{tpu_custom_call.1} parent=1 // pred_fallthru
      _
    %v41 = vld [vmem:[#allocation2] sm:$0xff]
    %v42 = vld [vmem:[#allocation5] sm:$0xff]
    %v43 = vld [vmem:[#allocation5 + $0x8] sm:$0xff]
    %v44 = vld [vmem:[#allocation5 + $0x10] sm:$0xff]
    %v45 = vld [vmem:[#allocation5 + $0x18] sm:$0xff]
    %v46 = vld [vmem:[#allocation5 + $0x20] sm:$0xff]
    %v47 = vld [vmem:[#allocation5 + $0x28] sm:$0xff]
    %v48 = vld [vmem:[#allocation5 + $0x30] sm:$0xff]
    %v49 = vld [vmem:[#allocation5 + $0x38] sm:$0xff]
    %v50 = vld [vmem:[#allocation5 + $0x40] sm:$0xff]
    %v51 = vld [vmem:[#allocation5 + $0x48] sm:$0xff]
    %v52 = vld [vmem:[#allocation5 + $0x50] sm:$0xff]
    %v53 = vld [vmem:[#allocation5 + $0x58] sm:$0xff]
    %v54 = vld [vmem:[#allocation5 + $0x60] sm:$0xff]
    %v55 = vld [vmem:[#allocation5 + $0x68] sm:$0xff]
    %v56 = vld [vmem:[#allocation5 + $0x70] sm:$0xff]
    %v57 = vld [vmem:[#allocation5 + $0x78] sm:$0xff]
    %v58 = vld [vmem:[%s2] sm:$0x1]
    %v60 = vlaneseq
    %v61 = vshrl.u32 %v60, 7
    %v62 = vsub.s32 0, %v61
    %v63 = vrot.slane %v58, %v62
    %65 = vmatprep.subr.mxu0 0.0
    %66 = vmatpush1.xpose.msra.mxu0 %v42
    %67 = vmatprep.subr.mxu0 0.0
    %68 = vmatpush1.xpose.msra.mxu0 %v43
    %69 = vmatprep.subr.mxu0 0.0
    %70 = vmatpush1.xpose.msra.mxu0 %v44
    %71 = vmatprep.subr.mxu0 0.0
    %72 = vmatpush1.xpose.msra.mxu0 %v45
    %73 = vmatprep.subr.mxu0 0.0
    %74 = vmatpush1.xpose.msra.mxu0 %v46
    %75 = vmatprep.subr.mxu0 0.0
    %76 = vmatpush1.xpose.msra.mxu0 %v47
    %77 = vmatprep.subr.mxu0 0.0
    %78 = vmatpush1.xpose.msra.mxu0 %v48
    %79 = vmatprep.subr.mxu0 0.0
    %80 = vmatpush1.xpose.msra.mxu0 %v49
    %81 = vmatprep.subr.mxu0 0.0
    %82 = vmatpush1.xpose.msra.mxu0 %v50
    %83 = vmatprep.subr.mxu0 0.0
    %84 = vmatpush1.xpose.msra.mxu0 %v51
    %85 = vmatprep.subr.mxu0 0.0
    %86 = vmatpush1.xpose.msra.mxu0 %v52
    %87 = vmatprep.subr.mxu0 0.0
    %88 = vmatpush1.xpose.msra.mxu0 %v53
    %89 = vmatprep.subr.mxu0 0.0
    %90 = vmatpush1.xpose.msra.mxu0 %v54
    %91 = vmatprep.subr.mxu0 0.0
    %92 = vmatpush1.xpose.msra.mxu0 %v55
    %93 = vmatprep.subr.mxu0 0.0
    %94 = vmatpush1.xpose.msra.mxu0 %v56
    %95 = vmatprep.subr.mxu0 0.0
    %96 = vmatpush1.xpose.msra.mxu0 %v57
    %97 = vmatprep.subr.mxu0 0.0
    %98 = vmatpush1.xpose.msra.mxu0 0.0
    %99 = vmatprep.subr.mxu0 0.0
    %100 = vmatpush1.xpose.msra.mxu0 0.0
    %101 = vmatprep.subr.mxu0 0.0
    %102 = vmatpush1.xpose.msra.mxu0 0.0
    %103 = vmatprep.subr.mxu0 0.0
    %104 = vmatpush1.xpose.msra.mxu0 0.0
    %105 = vmatprep.subr.mxu0 0.0
    %106 = vmatpush1.xpose.msra.mxu0 0.0
    %107 = vmatprep.subr.mxu0 0.0
    %108 = vmatpush1.xpose.msra.mxu0 0.0
    %109 = vmatprep.subr.mxu0 0.0
    %110 = vmatpush1.xpose.msra.mxu0 0.0
    %111 = vmatprep.subr.mxu0 0.0
    %112 = vmatpush1.xpose.msra.mxu0 0.0
    %113 = vmatprep.subr.mxu0 0.0
    %114 = vmatpush1.xpose.msra.mxu0 0.0
    %115 = vmatprep.subr.mxu0 0.0
    %116 = vmatpush1.xpose.msra.mxu0 0.0
    %117 = vmatprep.subr.mxu0 0.0
    %118 = vmatpush1.xpose.msra.mxu0 0.0
    %119 = vmatprep.subr.mxu0 0.0
    %120 = vmatpush1.xpose.msra.mxu0 0.0
    %121 = vmatprep.subr.mxu0 0.0
    %122 = vmatpush1.xpose.msra.mxu0 0.0
    %123 = vmatprep.subr.mxu0 0.0
    %124 = vmatpush1.xpose.msra.mxu0 0.0
    %125 = vmatprep.subr.mxu0 0.0
    %126 = vmatpush1.xpose.msra.mxu0 0.0
    %127 = vmatprep.subr.mxu0 0.0
    %128 = vmatpush1.xpose.msra.mxu0 0.0
    %129 = vmatprep.mubr.f32.mxu0 0.0
    %130 = vmatmul.mubr.f32.gmra.mrb[0].mxu0 %v41
    %v131 = vpop.f32.mrb[0].mxu0
    %v132 = vadd.f32 %v63, %v131
    %v133 = vpop.f32.mrb[0].mxu0
    %134 = vdwg.mxu0
    %135 = vst [vmem:[#allocation7] sm:$0xff] %v132
    // Predicated region
    $region22: #{tpu_custom_call.1} parent=1 // pred_check
      _
    $region23: #{tpu_custom_call.1} parent=1 // pred_check_branch
      %137 = sbr.rel (0) target = $region25
    $region24: #{tpu_custom_call.1} parent=1 // pred_region
      %s139 = ssub.s32 128, 128
      %140 = vsyncadd [#allocation4], %s139
      %s142 = sshll.u32 [#allocation7], 4
      %s143 = int_to_ptr.vmem [resolvable:$true] %s142
      %145 = dma.vmem_to_hbm [thread:$0]  %s143, 128, %s3, [#allocation4]
    $region25: #{tpu_custom_call.1} parent=1 // pred_fallthru
      _
    // Predicated region
    $region26: #{tpu_custom_call.1} parent=1 // pred_check
      _
    $region27: #{tpu_custom_call.1} parent=1 // pred_check_branch
      %147 = sbr.rel (0) target = $region29
    $region28: #{tpu_custom_call.1} parent=1 // pred_region
      %148 = dma.done [#allocation4], 128
    $region29: #{tpu_custom_call.1} parent=1 // pred_fallthru
      _
    %149 = vsyncpa [#allocation3], 1
    %150 = vsyncpa [#allocation6], 1
    %151 = vsyncpa [#allocation4], 1

</llo_original>
